<compile_context>
chip_gen: v7x
topology: tpu7x:2x2x1
jax: 0.10.0
libtpu: 0.0.40
codegen_flags: <defaults>
</compile_context>

<pallas_src>
import functools
from typing import NamedTuple

import jax
import jax.numpy as jnp
from jax import lax
from jax.experimental import pallas as pl
from jax.experimental.pallas import tpu as pltpu

LANES = 128


def _round_up(x, m):
    return (x + m - 1) // m * m


class PackMeta(NamedTuple):
    """Static layout of the packed parameter slab (hashable -> jit-static)."""
    V: int
    Vp: int
    H: int
    G: int
    r_emb: int    # rows [r_emb, r_emb+Vp)  : Emb @ W_ih^T + (b_ih+b_hh), lanes 0:4H
    r_whh: int    # rows [r_whh, r_whh+H)   : W_hh^T,                     lanes 0:4H
    r_wout: int   # rows [r_wout, r_wout+H) : W_out^T,                    lanes 0:G
    r_bout: int   # row   r_bout            : b_out,                      lanes 0:G


def pack_params(embedding, w_ih, w_hh, b_ih, b_hh, w_out, b_out):
    """One-time packing of all parameters into a single (R, 128) f32 slab."""
    V, E = embedding.shape
    H = w_hh.shape[1]
    G = w_out.shape[0]
    assert 4 * H <= LANES, "this packing assumes 4*H <= 128 lanes"
    assert G <= LANES

    Vp = _round_up(V, 8)
    Hp = _round_up(H, 8)
    r_emb = 0
    r_whh = Vp
    r_wout = r_whh + Hp
    r_bout = r_wout + Hp
    R = r_bout + 8                                   # multiple of 8 rows

    # Fuse Embedding and the input projection (+ bias) ahead of time:
    # one-hot(id) @ (Emb @ W_ih^T + b)  ==  Emb[id] @ W_ih^T + b   (exactly).
    emb_gates = embedding @ w_ih.T + (b_ih + b_hh)[None, :]        # (V, 4H)

    slab = jnp.zeros((R, LANES), jnp.float32)
    slab = slab.at[r_emb:r_emb + V, 0:4 * H].set(emb_gates.astype(jnp.float32))
    slab = slab.at[r_whh:r_whh + H, 0:4 * H].set(w_hh.T.astype(jnp.float32))
    slab = slab.at[r_wout:r_wout + H, 0:G].set(w_out.T.astype(jnp.float32))
    slab = slab.at[r_bout, 0:G].set(b_out.astype(jnp.float32))

    meta = PackMeta(V=V, Vp=Vp, H=H, G=G,
                    r_emb=r_emb, r_whh=r_whh, r_wout=r_wout, r_bout=r_bout)
    return slab, meta


def lstm_kernel(sent_ref, params_ref, o_ref, *, T, Bp, meta):
    """Full LSTM forward in one invocation (grid=()).

    sent_ref:   (T*Bp, 1) int32   token ids, time-major flattened (row = t*Bp + b)
    params_ref: (R, 128)  f32     packed parameter slab (see PackMeta)
    o_ref:      (Bp, 128) f32     lane-dense output; lanes 0:G hold the probs
    """
    Vp, H = meta.Vp, meta.H
    G4 = 4 * H
    TB = T * Bp

    # ---- Fused embedding gather straight into gate space (MXU one-hot matmul;
    #      no dynamic indexing; out-of-range ids yield a zero gate row). ----
    ids = sent_ref[...]                                          # (TB, 1) int32
    iota_v = lax.broadcasted_iota(jnp.int32, (TB, Vp), 1)        # (TB, Vp)
    one_hot = (iota_v == ids).astype(jnp.float32)                # (TB, Vp)
    emb_gates = params_ref[meta.r_emb:meta.r_emb + Vp, 0:G4]     # (Vp, 4H)
    xg_all = jnp.dot(one_hot, emb_gates,
                     preferred_element_type=jnp.float32)         # (TB, 4H)

    w_hh = params_ref[meta.r_whh:meta.r_whh + H, 0:G4]           # (H, 4H)

    h = jnp.zeros((Bp, H), jnp.float32)
    c = jnp.zeros((Bp, H), jnp.float32)

    # ---- Recurrence: T tiny & static -> fully unrolled, h/c stay in vregs.
    #      Bp = 8 keeps every slice sublane-group aligned. ----
    for t in range(T):
        gates = (xg_all[t * Bp:(t + 1) * Bp, :]
                 + jnp.dot(h, w_hh, preferred_element_type=jnp.float32))  # (Bp, 4H)
        # One sigmoid + one tanh over the full 128-lane gates vreg (2 EUP
        # pushes), then take the 32-lane i/f/g/o views (torch order i,f,g,o).
        sig_all = jax.nn.sigmoid(gates)
        tanh_all = jnp.tanh(gates)
        i_g = sig_all[:, 0 * H:1 * H]
        f_g = sig_all[:, 1 * H:2 * H]
        g_g = tanh_all[:, 2 * H:3 * H]
        o_g = sig_all[:, 3 * H:4 * H]
        c = f_g * c + i_g * g_g
        h = o_g * jnp.tanh(c)

    # ---- Final Linear + sigmoid on the last hidden state (lane-dense store;
    #      lanes >= G are sigmoid(0) garbage and sliced off in the wrapper). ----
    w_out = params_ref[meta.r_wout:meta.r_wout + H, :]           # (H, 128)
    b_out = params_ref[meta.r_bout:meta.r_bout + 1, :]           # (1, 128)
    logits = jnp.dot(h, w_out, preferred_element_type=jnp.float32) + b_out
    o_ref[...] = jax.nn.sigmoid(logits).astype(o_ref.dtype)


@functools.partial(jax.jit, static_argnames=("meta",))
def bilstm_forward(sentence, packed, *, meta):
    """sentence: (T, B) int32 token ids (time-major, like torch nn.LSTM)."""
    T, B = sentence.shape
    Bp = _round_up(max(B, 8), 8)                  # pad batch to one sublane group

    sent = jnp.zeros((T, Bp), jnp.int32).at[:, :B].set(sentence.astype(jnp.int32))
    sent_flat = sent.reshape(T * Bp, 1)           # row = t*Bp + b

    kernel = functools.partial(lstm_kernel, T=T, Bp=Bp, meta=meta)
    vmem = lambda: pl.BlockSpec(memory_space=pltpu.MemorySpace.VMEM)
    out = pl.pallas_call(
        kernel,
        out_shape=jax.ShapeDtypeStruct((Bp, LANES), jnp.float32),
        in_specs=[vmem(), vmem()],
        out_specs=vmem(),
    )(sent_flat, packed)
    return out[:B, :meta.G]


def reference_forward(sentence, embedding, w_ih, w_hh, b_ih, b_hh, w_out, b_out):
    """Pure-JAX reference mirroring torch semantics."""
    x = jnp.take(embedding, sentence, axis=0)  # (T, B, E)
    B = x.shape[1]
    H = w_hh.shape[1]

    def step(carry, x_t):
        h, c = carry
        gates = x_t @ w_ih.T + h @ w_hh.T + b_ih + b_hh
        i_g = jax.nn.sigmoid(gates[:, 0 * H:1 * H])
        f_g = jax.nn.sigmoid(gates[:, 1 * H:2 * H])
        g_g = jnp.tanh(gates[:, 2 * H:3 * H])
        o_g = jax.nn.sigmoid(gates[:, 3 * H:4 * H])
        c = f_g * c + i_g * g_g
        h = o_g * jnp.tanh(c)
        return (h, c), None

    h0 = jnp.zeros((B, H), jnp.float32)
    c0 = jnp.zeros((B, H), jnp.float32)
    (h_T, _), _ = lax.scan(step, (h0, c0), x)
    return jax.nn.sigmoid(h_T @ w_out.T + b_out)


if __name__ == "__main__":
    # Small deterministic config implied by the module's __init__.
    vocab_size = 50
    genre_size = 8
    embedding_dim = 32
    hidden_dim = 32
    seq_len = 8
    batch = 2

    key = jax.random.PRNGKey(0)
    ks = jax.random.split(key, 8)

    embedding = jax.random.normal(ks[0], (vocab_size, embedding_dim), jnp.float32) * 0.1
    w_ih = jax.random.normal(ks[1], (4 * hidden_dim, embedding_dim), jnp.float32) * 0.1
    w_hh = jax.random.normal(ks[2], (4 * hidden_dim, hidden_dim), jnp.float32) * 0.1
    b_ih = jax.random.normal(ks[3], (4 * hidden_dim,), jnp.float32) * 0.1
    b_hh = jax.random.normal(ks[4], (4 * hidden_dim,), jnp.float32) * 0.1
    w_out = jax.random.normal(ks[5], (genre_size, hidden_dim), jnp.float32) * 0.1
    b_out = jax.random.normal(ks[6], (genre_size,), jnp.float32) * 0.1

    sentence = jax.random.randint(ks[7], (seq_len, batch), 0, vocab_size, jnp.int32)

    # One-time parameter packing (out of the per-call path).
    packed, meta = pack_params(embedding, w_ih, w_hh, b_ih, b_hh, w_out, b_out)
    packed = jax.block_until_ready(packed)

    probs = bilstm_forward(sentence, packed, meta=meta)
    probs = jax.block_until_ready(probs)

    ref = reference_forward(sentence, embedding, w_ih, w_hh, b_ih, b_hh, w_out, b_out)
    assert probs.shape == (batch, genre_size)
    assert jnp.allclose(probs, ref, atol=1e-5, rtol=1e-5), (probs, ref)

    print("KERNEL_OK")
</pallas_src>

<mosaic_0001>
module attributes {stable_mosaic.version = 11 : i64} {
  func.func @lstm_kernel(%arg0: memref<64x1xi32, #tpu.memory_space<vmem>>, %arg1: memref<128x128xf32, #tpu.memory_space<vmem>>, %arg2: memref<8x128xf32, #tpu.memory_space<vmem>>) attributes {dimension_semantics = [], scalar_prefetch = 0 : i64, scratch_operands = 0 : i64, tpu.core_type = #tpu.core_type<tc>} {
    %c0 = arith.constant 0 : index
    %c0_0 = arith.constant 0 : index
    %0 = vector.load %arg0[%c0, %c0_0] : memref<64x1xi32, #tpu.memory_space<vmem>>, vector<64x1xi32>
    %1 = tpu.iota {dimensions = array<i32: 1>} : vector<64x56xi32>
    %2 = vector.broadcast %0 : vector<64x1xi32> to vector<64x56xi32>
    %3 = arith.cmpi eq, %1, %2 : vector<64x56xi32>
    %4 = arith.extui %3 : vector<64x56xi1> to vector<64x56xi32>
    %5 = arith.sitofp %4 : vector<64x56xi32> to vector<64x56xf32>
    %c0_1 = arith.constant 0 : index
    %c0_2 = arith.constant 0 : index
    %6 = vector.load %arg1[%c0_1, %c0_2] : memref<128x128xf32, #tpu.memory_space<vmem>>, vector<56x128xf32>
    %cst = arith.constant dense<0.000000e+00> : vector<64x128xf32>
    %7 = tpu.matmul %5, %6, %cst {dimension_numbers = #tpu.dot_dimension_numbers<[1], [0], [0], [1], [0, 0, 1, 1], [], []>} : vector<64x56xf32>, vector<56x128xf32>, vector<64x128xf32> -> vector<64x128xf32>
    %c56 = arith.constant 56 : index
    %c0_3 = arith.constant 0 : index
    %8 = vector.load %arg1[%c56, %c0_3] : memref<128x128xf32, #tpu.memory_space<vmem>>, vector<32x128xf32>
    %cst_4 = arith.constant 0.000000e+00 : f32
    %9 = vector.broadcast %cst_4 : f32 to vector<8x32xf32>
    %cst_5 = arith.constant 0.000000e+00 : f32
    %10 = vector.broadcast %cst_5 : f32 to vector<8x32xf32>
    %11 = vector.extract_strided_slice %7 {offsets = [0, 0], sizes = [8, 128], strides = [1, 1]} : vector<64x128xf32> to vector<8x128xf32>
    %cst_6 = arith.constant dense<0.000000e+00> : vector<8x128xf32>
    %12 = tpu.matmul %9, %8, %cst_6 {dimension_numbers = #tpu.dot_dimension_numbers<[1], [0], [0], [1], [0, 0, 1, 1], [], []>} : vector<8x32xf32>, vector<32x128xf32>, vector<8x128xf32> -> vector<8x128xf32>
    %13 = arith.addf %11, %12 : vector<8x128xf32>
    %14 = arith.negf %13 : vector<8x128xf32>
    %15 = math.exp %14 : vector<8x128xf32>
    %cst_7 = arith.constant 1.000000e+00 : f32
    %16 = vector.broadcast %cst_7 : f32 to vector<8x128xf32>
    %17 = arith.addf %16, %15 : vector<8x128xf32>
    %18 = arith.divf %16, %17 : vector<8x128xf32>
    %19 = math.tanh %13 : vector<8x128xf32>
    %20 = vector.extract_strided_slice %18 {offsets = [0, 0], sizes = [8, 32], strides = [1, 1]} : vector<8x128xf32> to vector<8x32xf32>
    %21 = vector.extract_strided_slice %18 {offsets = [0, 32], sizes = [8, 32], strides = [1, 1]} : vector<8x128xf32> to vector<8x32xf32>
    %22 = vector.extract_strided_slice %19 {offsets = [0, 64], sizes = [8, 32], strides = [1, 1]} : vector<8x128xf32> to vector<8x32xf32>
    %23 = vector.extract_strided_slice %18 {offsets = [0, 96], sizes = [8, 32], strides = [1, 1]} : vector<8x128xf32> to vector<8x32xf32>
    %24 = arith.mulf %21, %10 : vector<8x32xf32>
    %25 = arith.mulf %20, %22 : vector<8x32xf32>
    %26 = arith.addf %24, %25 : vector<8x32xf32>
    %27 = math.tanh %26 : vector<8x32xf32>
    %28 = arith.mulf %23, %27 : vector<8x32xf32>
    %29 = vector.extract_strided_slice %7 {offsets = [8, 0], sizes = [8, 128], strides = [1, 1]} : vector<64x128xf32> to vector<8x128xf32>
    %cst_8 = arith.constant dense<0.000000e+00> : vector<8x128xf32>
    %30 = tpu.matmul %28, %8, %cst_8 {dimension_numbers = #tpu.dot_dimension_numbers<[1], [0], [0], [1], [0, 0, 1, 1], [], []>} : vector<8x32xf32>, vector<32x128xf32>, vector<8x128xf32> -> vector<8x128xf32>
    %31 = arith.addf %29, %30 : vector<8x128xf32>
    %32 = arith.negf %31 : vector<8x128xf32>
    %33 = math.exp %32 : vector<8x128xf32>
    %cst_9 = arith.constant 1.000000e+00 : f32
    %34 = vector.broadcast %cst_9 : f32 to vector<8x128xf32>
    %35 = arith.addf %34, %33 : vector<8x128xf32>
    %36 = arith.divf %34, %35 : vector<8x128xf32>
    %37 = math.tanh %31 : vector<8x128xf32>
    %38 = vector.extract_strided_slice %36 {offsets = [0, 0], sizes = [8, 32], strides = [1, 1]} : vector<8x128xf32> to vector<8x32xf32>
    %39 = vector.extract_strided_slice %36 {offsets = [0, 32], sizes = [8, 32], strides = [1, 1]} : vector<8x128xf32> to vector<8x32xf32>
    %40 = vector.extract_strided_slice %37 {offsets = [0, 64], sizes = [8, 32], strides = [1, 1]} : vector<8x128xf32> to vector<8x32xf32>
    %41 = vector.extract_strided_slice %36 {offsets = [0, 96], sizes = [8, 32], strides = [1, 1]} : vector<8x128xf32> to vector<8x32xf32>
    %42 = arith.mulf %39, %26 : vector<8x32xf32>
    %43 = arith.mulf %38, %40 : vector<8x32xf32>
    %44 = arith.addf %42, %43 : vector<8x32xf32>
    %45 = math.tanh %44 : vector<8x32xf32>
    %46 = arith.mulf %41, %45 : vector<8x32xf32>
    %47 = vector.extract_strided_slice %7 {offsets = [16, 0], sizes = [8, 128], strides = [1, 1]} : vector<64x128xf32> to vector<8x128xf32>
    %cst_10 = arith.constant dense<0.000000e+00> : vector<8x128xf32>
    %48 = tpu.matmul %46, %8, %cst_10 {dimension_numbers = #tpu.dot_dimension_numbers<[1], [0], [0], [1], [0, 0, 1, 1], [], []>} : vector<8x32xf32>, vector<32x128xf32>, vector<8x128xf32> -> vector<8x128xf32>
    %49 = arith.addf %47, %48 : vector<8x128xf32>
    %50 = arith.negf %49 : vector<8x128xf32>
    %51 = math.exp %50 : vector<8x128xf32>
    %cst_11 = arith.constant 1.000000e+00 : f32
    %52 = vector.broadcast %cst_11 : f32 to vector<8x128xf32>
    %53 = arith.addf %52, %51 : vector<8x128xf32>
    %54 = arith.divf %52, %53 : vector<8x128xf32>
    %55 = math.tanh %49 : vector<8x128xf32>
    %56 = vector.extract_strided_slice %54 {offsets = [0, 0], sizes = [8, 32], strides = [1, 1]} : vector<8x128xf32> to vector<8x32xf32>
    %57 = vector.extract_strided_slice %54 {offsets = [0, 32], sizes = [8, 32], strides = [1, 1]} : vector<8x128xf32> to vector<8x32xf32>
    %58 = vector.extract_strided_slice %55 {offsets = [0, 64], sizes = [8, 32], strides = [1, 1]} : vector<8x128xf32> to vector<8x32xf32>
    %59 = vector.extract_strided_slice %54 {offsets = [0, 96], sizes = [8, 32], strides = [1, 1]} : vector<8x128xf32> to vector<8x32xf32>
    %60 = arith.mulf %57, %44 : vector<8x32xf32>
    %61 = arith.mulf %56, %58 : vector<8x32xf32>
    %62 = arith.addf %60, %61 : vector<8x32xf32>
    %63 = math.tanh %62 : vector<8x32xf32>
    %64 = arith.mulf %59, %63 : vector<8x32xf32>
    %65 = vector.extract_strided_slice %7 {offsets = [24, 0], sizes = [8, 128], strides = [1, 1]} : vector<64x128xf32> to vector<8x128xf32>
    %cst_12 = arith.constant dense<0.000000e+00> : vector<8x128xf32>
    %66 = tpu.matmul %64, %8, %cst_12 {dimension_numbers = #tpu.dot_dimension_numbers<[1], [0], [0], [1], [0, 0, 1, 1], [], []>} : vector<8x32xf32>, vector<32x128xf32>, vector<8x128xf32> -> vector<8x128xf32>
    %67 = arith.addf %65, %66 : vector<8x128xf32>
    %68 = arith.negf %67 : vector<8x128xf32>
    %69 = math.exp %68 : vector<8x128xf32>
    %cst_13 = arith.constant 1.000000e+00 : f32
    %70 = vector.broadcast %cst_13 : f32 to vector<8x128xf32>
    %71 = arith.addf %70, %69 : vector<8x128xf32>
    %72 = arith.divf %70, %71 : vector<8x128xf32>
    %73 = math.tanh %67 : vector<8x128xf32>
    %74 = vector.extract_strided_slice %72 {offsets = [0, 0], sizes = [8, 32], strides = [1, 1]} : vector<8x128xf32> to vector<8x32xf32>
    %75 = vector.extract_strided_slice %72 {offsets = [0, 32], sizes = [8, 32], strides = [1, 1]} : vector<8x128xf32> to vector<8x32xf32>
    %76 = vector.extract_strided_slice %73 {offsets = [0, 64], sizes = [8, 32], strides = [1, 1]} : vector<8x128xf32> to vector<8x32xf32>
    %77 = vector.extract_strided_slice %72 {offsets = [0, 96], sizes = [8, 32], strides = [1, 1]} : vector<8x128xf32> to vector<8x32xf32>
    %78 = arith.mulf %75, %62 : vector<8x32xf32>
    %79 = arith.mulf %74, %76 : vector<8x32xf32>
    %80 = arith.addf %78, %79 : vector<8x32xf32>
    %81 = math.tanh %80 : vector<8x32xf32>
    %82 = arith.mulf %77, %81 : vector<8x32xf32>
    %83 = vector.extract_strided_slice %7 {offsets = [32, 0], sizes = [8, 128], strides = [1, 1]} : vector<64x128xf32> to vector<8x128xf32>
    %cst_14 = arith.constant dense<0.000000e+00> : vector<8x128xf32>
    %84 = tpu.matmul %82, %8, %cst_14 {dimension_numbers = #tpu.dot_dimension_numbers<[1], [0], [0], [1], [0, 0, 1, 1], [], []>} : vector<8x32xf32>, vector<32x128xf32>, vector<8x128xf32> -> vector<8x128xf32>
    %85 = arith.addf %83, %84 : vector<8x128xf32>
    %86 = arith.negf %85 : vector<8x128xf32>
    %87 = math.exp %86 : vector<8x128xf32>
    %cst_15 = arith.constant 1.000000e+00 : f32
    %88 = vector.broadcast %cst_15 : f32 to vector<8x128xf32>
    %89 = arith.addf %88, %87 : vector<8x128xf32>
    %90 = arith.divf %88, %89 : vector<8x128xf32>
    %91 = math.tanh %85 : vector<8x128xf32>
    %92 = vector.extract_strided_slice %90 {offsets = [0, 0], sizes = [8, 32], strides = [1, 1]} : vector<8x128xf32> to vector<8x32xf32>
    %93 = vector.extract_strided_slice %90 {offsets = [0, 32], sizes = [8, 32], strides = [1, 1]} : vector<8x128xf32> to vector<8x32xf32>
    %94 = vector.extract_strided_slice %91 {offsets = [0, 64], sizes = [8, 32], strides = [1, 1]} : vector<8x128xf32> to vector<8x32xf32>
    %95 = vector.extract_strided_slice %90 {offsets = [0, 96], sizes = [8, 32], strides = [1, 1]} : vector<8x128xf32> to vector<8x32xf32>
    %96 = arith.mulf %93, %80 : vector<8x32xf32>
    %97 = arith.mulf %92, %94 : vector<8x32xf32>
    %98 = arith.addf %96, %97 : vector<8x32xf32>
    %99 = math.tanh %98 : vector<8x32xf32>
    %100 = arith.mulf %95, %99 : vector<8x32xf32>
    %101 = vector.extract_strided_slice %7 {offsets = [40, 0], sizes = [8, 128], strides = [1, 1]} : vector<64x128xf32> to vector<8x128xf32>
    %cst_16 = arith.constant dense<0.000000e+00> : vector<8x128xf32>
    %102 = tpu.matmul %100, %8, %cst_16 {dimension_numbers = #tpu.dot_dimension_numbers<[1], [0], [0], [1], [0, 0, 1, 1], [], []>} : vector<8x32xf32>, vector<32x128xf32>, vector<8x128xf32> -> vector<8x128xf32>
    %103 = arith.addf %101, %102 : vector<8x128xf32>
    %104 = arith.negf %103 : vector<8x128xf32>
    %105 = math.exp %104 : vector<8x128xf32>
    %cst_17 = arith.constant 1.000000e+00 : f32
    %106 = vector.broadcast %cst_17 : f32 to vector<8x128xf32>
    %107 = arith.addf %106, %105 : vector<8x128xf32>
    %108 = arith.divf %106, %107 : vector<8x128xf32>
    %109 = math.tanh %103 : vector<8x128xf32>
    %110 = vector.extract_strided_slice %108 {offsets = [0, 0], sizes = [8, 32], strides = [1, 1]} : vector<8x128xf32> to vector<8x32xf32>
    %111 = vector.extract_strided_slice %108 {offsets = [0, 32], sizes = [8, 32], strides = [1, 1]} : vector<8x128xf32> to vector<8x32xf32>
    %112 = vector.extract_strided_slice %109 {offsets = [0, 64], sizes = [8, 32], strides = [1, 1]} : vector<8x128xf32> to vector<8x32xf32>
    %113 = vector.extract_strided_slice %108 {offsets = [0, 96], sizes = [8, 32], strides = [1, 1]} : vector<8x128xf32> to vector<8x32xf32>
    %114 = arith.mulf %111, %98 : vector<8x32xf32>
    %115 = arith.mulf %110, %112 : vector<8x32xf32>
    %116 = arith.addf %114, %115 : vector<8x32xf32>
    %117 = math.tanh %116 : vector<8x32xf32>
    %118 = arith.mulf %113, %117 : vector<8x32xf32>
    %119 = vector.extract_strided_slice %7 {offsets = [48, 0], sizes = [8, 128], strides = [1, 1]} : vector<64x128xf32> to vector<8x128xf32>
    %cst_18 = arith.constant dense<0.000000e+00> : vector<8x128xf32>
    %120 = tpu.matmul %118, %8, %cst_18 {dimension_numbers = #tpu.dot_dimension_numbers<[1], [0], [0], [1], [0, 0, 1, 1], [], []>} : vector<8x32xf32>, vector<32x128xf32>, vector<8x128xf32> -> vector<8x128xf32>
    %121 = arith.addf %119, %120 : vector<8x128xf32>
    %122 = arith.negf %121 : vector<8x128xf32>
    %123 = math.exp %122 : vector<8x128xf32>
    %cst_19 = arith.constant 1.000000e+00 : f32
    %124 = vector.broadcast %cst_19 : f32 to vector<8x128xf32>
    %125 = arith.addf %124, %123 : vector<8x128xf32>
    %126 = arith.divf %124, %125 : vector<8x128xf32>
    %127 = math.tanh %121 : vector<8x128xf32>
    %128 = vector.extract_strided_slice %126 {offsets = [0, 0], sizes = [8, 32], strides = [1, 1]} : vector<8x128xf32> to vector<8x32xf32>
    %129 = vector.extract_strided_slice %126 {offsets = [0, 32], sizes = [8, 32], strides = [1, 1]} : vector<8x128xf32> to vector<8x32xf32>
    %130 = vector.extract_strided_slice %127 {offsets = [0, 64], sizes = [8, 32], strides = [1, 1]} : vector<8x128xf32> to vector<8x32xf32>
    %131 = vector.extract_strided_slice %126 {offsets = [0, 96], sizes = [8, 32], strides = [1, 1]} : vector<8x128xf32> to vector<8x32xf32>
    %132 = arith.mulf %129, %116 : vector<8x32xf32>
    %133 = arith.mulf %128, %130 : vector<8x32xf32>
    %134 = arith.addf %132, %133 : vector<8x32xf32>
    %135 = math.tanh %134 : vector<8x32xf32>
    %136 = arith.mulf %131, %135 : vector<8x32xf32>
    %137 = vector.extract_strided_slice %7 {offsets = [56, 0], sizes = [8, 128], strides = [1, 1]} : vector<64x128xf32> to vector<8x128xf32>
    %cst_20 = arith.constant dense<0.000000e+00> : vector<8x128xf32>
    %138 = tpu.matmul %136, %8, %cst_20 {dimension_numbers = #tpu.dot_dimension_numbers<[1], [0], [0], [1], [0, 0, 1, 1], [], []>} : vector<8x32xf32>, vector<32x128xf32>, vector<8x128xf32> -> vector<8x128xf32>
    %139 = arith.addf %137, %138 : vector<8x128xf32>
    %140 = arith.negf %139 : vector<8x128xf32>
    %141 = math.exp %140 : vector<8x128xf32>
    %cst_21 = arith.constant 1.000000e+00 : f32
    %142 = vector.broadcast %cst_21 : f32 to vector<8x128xf32>
    %143 = arith.addf %142, %141 : vector<8x128xf32>
    %144 = arith.divf %142, %143 : vector<8x128xf32>
    %145 = math.tanh %139 : vector<8x128xf32>
    %146 = vector.extract_strided_slice %144 {offsets = [0, 0], sizes = [8, 32], strides = [1, 1]} : vector<8x128xf32> to vector<8x32xf32>
    %147 = vector.extract_strided_slice %144 {offsets = [0, 32], sizes = [8, 32], strides = [1, 1]} : vector<8x128xf32> to vector<8x32xf32>
    %148 = vector.extract_strided_slice %145 {offsets = [0, 64], sizes = [8, 32], strides = [1, 1]} : vector<8x128xf32> to vector<8x32xf32>
    %149 = vector.extract_strided_slice %144 {offsets = [0, 96], sizes = [8, 32], strides = [1, 1]} : vector<8x128xf32> to vector<8x32xf32>
    %150 = arith.mulf %147, %134 : vector<8x32xf32>
    %151 = arith.mulf %146, %148 : vector<8x32xf32>
    %152 = arith.addf %150, %151 : vector<8x32xf32>
    %153 = math.tanh %152 : vector<8x32xf32>
    %154 = arith.mulf %149, %153 : vector<8x32xf32>
    %c88 = arith.constant 88 : index
    %c0_22 = arith.constant 0 : index
    %155 = vector.load %arg1[%c88, %c0_22] : memref<128x128xf32, #tpu.memory_space<vmem>>, vector<32x128xf32>
    %c120 = arith.constant 120 : index
    %c0_23 = arith.constant 0 : index
    %156 = vector.load %arg1[%c120, %c0_23] : memref<128x128xf32, #tpu.memory_space<vmem>>, vector<1x128xf32>
    %cst_24 = arith.constant dense<0.000000e+00> : vector<8x128xf32>
    %157 = tpu.matmul %154, %155, %cst_24 {dimension_numbers = #tpu.dot_dimension_numbers<[1], [0], [0], [1], [0, 0, 1, 1], [], []>} : vector<8x32xf32>, vector<32x128xf32>, vector<8x128xf32> -> vector<8x128xf32>
    %158 = vector.broadcast %156 : vector<1x128xf32> to vector<8x128xf32>
    %159 = arith.addf %157, %158 : vector<8x128xf32>
    %160 = arith.negf %159 : vector<8x128xf32>
    %161 = math.exp %160 : vector<8x128xf32>
    %cst_25 = arith.constant 1.000000e+00 : f32
    %162 = vector.broadcast %cst_25 : f32 to vector<8x128xf32>
    %163 = arith.addf %162, %161 : vector<8x128xf32>
    %164 = arith.divf %162, %163 : vector<8x128xf32>
    %c0_26 = arith.constant 0 : index
    %c0_27 = arith.constant 0 : index
    %165 = vector.load %arg2[%c0_26, %c0_27] : memref<8x128xf32, #tpu.memory_space<vmem>>, vector<8x128xf32>
    tpu.vector_store %arg2[%c0_26, %c0_27], %164 {strides = array<i32>} : memref<8x128xf32, #tpu.memory_space<vmem>>, vector<8x128xf32>,
    return
  }
}

</mosaic_0001>

<llo_original>
// kernel: bilstm_forward.1
$region0: #{bilstm_forward.1}
  #allocation0 [shape = 'u32[]', space=smem, size = 0x4, offset = 0x4, fixed_abs, tag = 'smem constant byte address 0x4 - core index']
  #allocation1 [shape = 'u32[144,128]{1,0:T(1,128)}', space=vmem, size = 0x12000, scoped, tag = 'internal scratch']
  %s0 = inlined_call_operand.vmem [shape: s32[64,1], index: 0, kind: input, shape index: {}]
  %s1 = inlined_call_operand.hbm [shape: f32[128,128], index: 1, kind: input, shape index: {}]
  %s2 = inlined_call_operand.vmem [shape: f32[8,128], index: 2, kind: output, shape index: {}]
  %s3 = sld [smem:[#allocation0]]
  $region22: #{bilstm_forward.1} parent=0
    _
  %s5 = ssub.s32 1, %s3
  %s6 = scalar_select 0, %s5, %s3
  $region1: #{bilstm_forward.1} parent=0
    #allocation2 [shape = 'u8[65536]{0}', space=vmem, size = 0x10000, scoped, tag = 'input window, operand 1, single buffered']
    #allocation3 [shape = 's32[1]{0}', space=sflag, size = 0x4, scoped, tag = 'scoped memory for bilstm_forward.1']
    %7 = vsyncpa [#allocation3], 0
    // Predicated region
    $region2: #{bilstm_forward.1} parent=1 // pred_check
      _
    $region3: #{bilstm_forward.1} parent=1 // pred_check_branch
      %9 = sbr.rel (0) target = $region5
    $region4: #{bilstm_forward.1} parent=1 // pred_region
      _
    $region5: #{bilstm_forward.1} parent=1 // pred_fallthru
      _
    // Predicated region
    $region6: #{bilstm_forward.1} parent=1 // pred_check
      _
    $region7: #{bilstm_forward.1} parent=1 // pred_check_branch
      %11 = sbr.rel (0) target = $region9
    $region8: #{bilstm_forward.1} parent=1 // pred_region
      %s13 = ssub.s32 2048, 2048
      %14 = vsyncadd [#allocation3], %s13
      %s15 = sshll.u32 [#allocation2], 4
      %s16 = int_to_ptr.vmem [resolvable:$true] %s15
      %21 = dma.hbm_to_vmem [thread:$0]  %s1, 2048, %s16, [#allocation3], 128, 128, 8
    $region9: #{bilstm_forward.1} parent=1 // pred_fallthru
      _
    // Predicated region
    $region10: #{bilstm_forward.1} parent=1 // pred_check
      _
    $region11: #{bilstm_forward.1} parent=1 // pred_check_branch
      %23 = sbr.rel (0) target = $region13
    $region12: #{bilstm_forward.1} parent=1 // pred_region
      %24 = dma.done [#allocation3], 2048
    $region13: #{bilstm_forward.1} parent=1 // pred_fallthru
      _
    %v25 = vld [vmem:[%s0] sm:$0xff]
    %v26 = vld [vmem:[%s0 + $0x8] sm:$0xff]
    %v27 = vld [vmem:[%s0 + $0x10] sm:$0xff]
    %v28 = vld [vmem:[%s0 + $0x18] sm:$0xff]
    %v29 = vld [vmem:[%s0 + $0x20] sm:$0xff]
    %v30 = vld [vmem:[%s0 + $0x28] sm:$0xff]
    %v31 = vld [vmem:[%s0 + $0x30] sm:$0xff]
    %v32 = vld [vmem:[%s0 + $0x38] sm:$0xff]
    %v33 = vlaneseq
    %v34 = vand.u32 %v33, 127
    %35 = vset.pattern.permute.xlu0 0
    %36 = vperm.xlu0 %35, %v25
    %v37 = vpop.permute.xlu0 %36
    %38 = vset.pattern.permute.xlu0 0
    %39 = vperm.xlu0 %38, %v26
    %v40 = vpop.permute.xlu0 %39
    %41 = vset.pattern.permute.xlu0 0
    %42 = vperm.xlu0 %41, %v27
    %v43 = vpop.permute.xlu0 %42
    %44 = vset.pattern.permute.xlu0 0
    %45 = vperm.xlu0 %44, %v28
    %v46 = vpop.permute.xlu0 %45
    %47 = vset.pattern.permute.xlu0 0
    %48 = vperm.xlu0 %47, %v29
    %v49 = vpop.permute.xlu0 %48
    %50 = vset.pattern.permute.xlu0 0
    %51 = vperm.xlu0 %50, %v30
    %v52 = vpop.permute.xlu0 %51
    %53 = vset.pattern.permute.xlu0 0
    %54 = vperm.xlu0 %53, %v31
    %v55 = vpop.permute.xlu0 %54
    %56 = vset.pattern.permute.xlu0 0
    %57 = vperm.xlu0 %56, %v32
    %v58 = vpop.permute.xlu0 %57
    %vm59 = vcmp.eq.s32.totalorder %v34, %v37
    %vm60 = vcmp.eq.s32.totalorder %v34, %v40
    %vm61 = vcmp.eq.s32.totalorder %v34, %v43
    %vm62 = vcmp.eq.s32.totalorder %v34, %v46
    %vm63 = vcmp.eq.s32.totalorder %v34, %v49
    %vm64 = vcmp.eq.s32.totalorder %v34, %v52
    %vm65 = vcmp.eq.s32.totalorder %v34, %v55
    %vm66 = vcmp.eq.s32.totalorder %v34, %v58
    %v67 = vsel %vm59, 1, 0
    %v68 = vsel %vm60, 1, 0
    %v69 = vsel %vm61, 1, 0
    %v70 = vsel %vm62, 1, 0
    %v71 = vsel %vm63, 1, 0
    %v72 = vsel %vm64, 1, 0
    %v73 = vsel %vm65, 1, 0
    %v74 = vsel %vm66, 1, 0
    %v75 = vcvt.s32.f32 %v67
    %v76 = vcvt.s32.f32 %v68
    %v77 = vcvt.s32.f32 %v69
    %v78 = vcvt.s32.f32 %v70
    %v79 = vcvt.s32.f32 %v71
    %v80 = vcvt.s32.f32 %v72
    %v81 = vcvt.s32.f32 %v73
    %v82 = vcvt.s32.f32 %v74
    %v83 = vld [vmem:[#allocation2] sm:$0xff]
    %v84 = vld [vmem:[#allocation2 + $0x8] sm:$0xff]
    %v85 = vld [vmem:[#allocation2 + $0x10] sm:$0xff]
    %v86 = vld [vmem:[#allocation2 + $0x18] sm:$0xff]
    %v87 = vld [vmem:[#allocation2 + $0x20] sm:$0xff]
    %v88 = vld [vmem:[#allocation2 + $0x28] sm:$0xff]
    %v89 = vld [vmem:[#allocation2 + $0x30] sm:$0xff]
    %vm90 = vcmask 457728
    %v92 = vsel %vm90, %v75, 0
    %v95 = vsel %vm90, %v76, 0
    %v98 = vsel %vm90, %v77, 0
    %v101 = vsel %vm90, %v78, 0
    %v104 = vsel %vm90, %v79, 0
    %v107 = vsel %vm90, %v80, 0
    %v110 = vsel %vm90, %v81, 0
    %v113 = vsel %vm90, %v82, 0
    %115 = vmatprep.subr.mxu0 0.0
    %116 = vmatpush1.msra.mxu0 %v83
    %117 = vmatprep.subr.mxu0 0.0
    %118 = vmatpush1.msra.mxu0 %v84
    %119 = vmatprep.subr.mxu0 0.0
    %120 = vmatpush1.msra.mxu0 %v85
    %121 = vmatprep.subr.mxu0 0.0
    %122 = vmatpush1.msra.mxu0 %v86
    %123 = vmatprep.subr.mxu0 0.0
    %124 = vmatpush1.msra.mxu0 %v87
    %125 = vmatprep.subr.mxu0 0.0
    %126 = vmatpush1.msra.mxu0 %v88
    %127 = vmatprep.subr.mxu0 0.0
    %128 = vmatpush1.msra.mxu0 %v89
    %129 = vmatprep.subr.mxu0 0.0
    %130 = vmatpush1.msra.mxu0 0.0
    %131 = vmatprep.subr.mxu0 0.0
    %132 = vmatpush1.msra.mxu0 0.0
    %133 = vmatprep.subr.mxu0 0.0
    %134 = vmatpush1.msra.mxu0 0.0
    %135 = vmatprep.subr.mxu0 0.0
    %136 = vmatpush1.msra.mxu0 0.0
    %137 = vmatprep.subr.mxu0 0.0
    %138 = vmatpush1.msra.mxu0 0.0
    %139 = vmatprep.subr.mxu0 0.0
    %140 = vmatpush1.msra.mxu0 0.0
    %141 = vmatprep.subr.mxu0 0.0
    %142 = vmatpush1.msra.mxu0 0.0
    %143 = vmatprep.subr.mxu0 0.0
    %144 = vmatpush1.msra.mxu0 0.0
    %145 = vmatprep.subr.mxu0 0.0
    %146 = vmatpush1.msra.mxu0 0.0
    %147 = vmatprep.subr.mxu0 0.0
    %148 = vmatpush1.msra.mxu0 0.0
    %149 = vmatprep.subr.mxu0 0.0
    %150 = vmatpush1.msra.mxu0 0.0
    %151 = vmatprep.subr.mxu0 0.0
    %152 = vmatpush1.msra.mxu0 0.0
    %153 = vmatprep.subr.mxu0 0.0
    %154 = vmatpush1.msra.mxu0 0.0
    %155 = vmatprep.subr.mxu0 0.0
    %156 = vmatpush1.msra.mxu0 0.0
    %157 = vmatprep.subr.mxu0 0.0
    %158 = vmatpush1.msra.mxu0 0.0
    %159 = vmatprep.subr.mxu0 0.0
    %160 = vmatpush1.msra.mxu0 0.0
    %161 = vmatprep.subr.mxu0 0.0
    %162 = vmatpush1.msra.mxu0 0.0
    %163 = vmatprep.subr.mxu0 0.0
    %164 = vmatpush1.msra.mxu0 0.0
    %165 = vmatprep.subr.mxu0 0.0
    %166 = vmatpush1.msra.mxu0 0.0
    %167 = vmatprep.subr.mxu0 0.0
    %168 = vmatpush1.msra.mxu0 0.0
    %169 = vmatprep.subr.mxu0 0.0
    %170 = vmatpush1.msra.mxu0 0.0
    %171 = vmatprep.subr.mxu0 0.0
    %172 = vmatpush1.msra.mxu0 0.0
    %173 = vmatprep.subr.mxu0 0.0
    %174 = vmatpush1.msra.mxu0 0.0
    %175 = vmatprep.subr.mxu0 0.0
    %176 = vmatpush1.msra.mxu0 0.0
    %177 = vmatprep.subr.mxu0 0.0
    %178 = vmatpush1.msra.mxu0 0.0
    %179 = vmatprep.mubr.f32.mxu0 0.0
    %180 = vmatmul.mubr.f32.gmra.mrb[0].mxu0 %v92
    %v181 = vpop.f32.mrb[0].mxu0
    %v182 = vadd.f32 0.0, %v181
    %v183 = vpop.f32.mrb[0].mxu0
    %184 = vmatprep.mubr.f32.mxu0 0.0
    %185 = vmatmul.mubr.f32.gmra.mrb[0].mxu0 %v95
    %v186 = vpop.f32.mrb[0].mxu0
    %v187 = vadd.f32 0.0, %v186
    %v188 = vpop.f32.mrb[0].mxu0
    %189 = vmatprep.mubr.f32.mxu0 0.0
    %190 = vmatmul.mubr.f32.gmra.mrb[0].mxu0 %v98
    %v191 = vpop.f32.mrb[0].mxu0
    %v192 = vadd.f32 0.0, %v191
    %v193 = vpop.f32.mrb[0].mxu0
    %194 = vmatprep.mubr.f32.mxu0 0.0
    %195 = vmatmul.mubr.f32.gmra.mrb[0].mxu0 %v101
    %v196 = vpop.f32.mrb[0].mxu0
    %v197 = vadd.f32 0.0, %v196
    %v198 = vpop.f32.mrb[0].mxu0
    %199 = vmatprep.mubr.f32.mxu0 0.0
    %200 = vmatmul.mubr.f32.gmra.mrb[0].mxu0 %v104
    %v201 = vpop.f32.mrb[0].mxu0
    %v202 = vadd.f32 0.0, %v201
    %v203 = vpop.f32.mrb[0].mxu0
    %204 = vmatprep.mubr.f32.mxu0 0.0
    %205 = vmatmul.mubr.f32.gmra.mrb[0].mxu0 %v107
    %v206 = vpop.f32.mrb[0].mxu0
    %v207 = vadd.f32 0.0, %v206
    %v208 = vpop.f32.mrb[0].mxu0
    %209 = vmatprep.mubr.f32.mxu0 0.0
    %210 = vmatmul.mubr.f32.gmra.mrb[0].mxu0 %v110
    %v211 = vpop.f32.mrb[0].mxu0
    %v212 = vadd.f32 0.0, %v211
    %v213 = vpop.f32.mrb[0].mxu0
    %214 = vmatprep.mubr.f32.mxu0 0.0
    %215 = vmatmul.mubr.f32.gmra.mrb[0].mxu0 %v113
    %v216 = vpop.f32.mrb[0].mxu0
    %v217 = vadd.f32 0.0, %v216
    %v218 = vpop.f32.mrb[0].mxu0
    %219 = vdwg.mxu0
    %v220 = vld [vmem:[#allocation2 + $0x38] sm:$0xff]
    %v221 = vld [vmem:[#allocation2 + $0x40] sm:$0xff]
    %v222 = vld [vmem:[#allocation2 + $0x48] sm:$0xff]
    %v223 = vld [vmem:[#allocation2 + $0x50] sm:$0xff]
    %vm224 = vcmask 261120
    %v226 = vsel %vm224, 0.0, 0
    %228 = vmatprep.subr.mxu0 0.0
    %229 = vmatpush1.msra.mxu0 %v220
    %230 = vmatprep.subr.mxu0 0.0
    %231 = vmatpush1.msra.mxu0 %v221
    %232 = vmatprep.subr.mxu0 0.0
    %233 = vmatpush1.msra.mxu0 %v222
    %234 = vmatprep.subr.mxu0 0.0
    %235 = vmatpush1.msra.mxu0 %v223
    %236 = vmatprep.subr.mxu0 0.0
    %237 = vmatpush1.msra.mxu0 0.0
    %238 = vmatprep.subr.mxu0 0.0
    %239 = vmatpush1.msra.mxu0 0.0
    %240 = vmatprep.subr.mxu0 0.0
    %241 = vmatpush1.msra.mxu0 0.0
    %242 = vmatprep.subr.mxu0 0.0
    %243 = vmatpush1.msra.mxu0 0.0
    %244 = vmatprep.subr.mxu0 0.0
    %245 = vmatpush1.msra.mxu0 0.0
    %246 = vmatprep.subr.mxu0 0.0
    %247 = vmatpush1.msra.mxu0 0.0
    %248 = vmatprep.subr.mxu0 0.0
    %249 = vmatpush1.msra.mxu0 0.0
    %250 = vmatprep.subr.mxu0 0.0
    %251 = vmatpush1.msra.mxu0 0.0
    %252 = vmatprep.subr.mxu0 0.0
    %253 = vmatpush1.msra.mxu0 0.0
    %254 = vmatprep.subr.mxu0 0.0
    %255 = vmatpush1.msra.mxu0 0.0
    %256 = vmatprep.subr.mxu0 0.0
    %257 = vmatpush1.msra.mxu0 0.0
    %258 = vmatprep.subr.mxu0 0.0
    %259 = vmatpush1.msra.mxu0 0.0
    %260 = vmatprep.subr.mxu0 0.0
    %261 = vmatpush1.msra.mxu0 0.0
    %262 = vmatprep.subr.mxu0 0.0
    %263 = vmatpush1.msra.mxu0 0.0
    %264 = vmatprep.subr.mxu0 0.0
    %265 = vmatpush1.msra.mxu0 0.0
    %266 = vmatprep.subr.mxu0 0.0
    %267 = vmatpush1.msra.mxu0 0.0
    %268 = vmatprep.subr.mxu0 0.0
    %269 = vmatpush1.msra.mxu0 0.0
    %270 = vmatprep.subr.mxu0 0.0
    %271 = vmatpush1.msra.mxu0 0.0
    %272 = vmatprep.subr.mxu0 0.0
    %273 = vmatpush1.msra.mxu0 0.0
    %274 = vmatprep.subr.mxu0 0.0
    %275 = vmatpush1.msra.mxu0 0.0
    %276 = vmatprep.subr.mxu0 0.0
    %277 = vmatpush1.msra.mxu0 0.0
    %278 = vmatprep.subr.mxu0 0.0
    %279 = vmatpush1.msra.mxu0 0.0
    %280 = vmatprep.subr.mxu0 0.0
    %281 = vmatpush1.msra.mxu0 0.0
    %282 = vmatprep.subr.mxu0 0.0
    %283 = vmatpush1.msra.mxu0 0.0
    %284 = vmatprep.subr.mxu0 0.0
    %285 = vmatpush1.msra.mxu0 0.0
    %286 = vmatprep.subr.mxu0 0.0
    %287 = vmatpush1.msra.mxu0 0.0
    %288 = vmatprep.subr.mxu0 0.0
    %289 = vmatpush1.msra.mxu0 0.0
    %290 = vmatprep.subr.mxu0 0.0
    %291 = vmatpush1.msra.mxu0 0.0
    %292 = vmatprep.mubr.f32.mxu0 0.0
    %293 = vmatmul.mubr.f32.gmra.mrb[0].mxu0 %v226
    %v294 = vpop.f32.mrb[0].mxu0
    %v295 = vadd.f32 0.0, %v294
    %v296 = vpop.f32.mrb[0].mxu0
    %297 = vdwg.mxu0
    %v298 = vadd.f32 %v182, %v295
    %v299 = vxor.u32 %v298, 2147483648
    %v300 = vmul.f32 %v299, 1.442695
    %v301 = vpow.pop %v300
    %v302 = vadd.f32 %v301, 1.0
    %v303 = vrcp.pop %v302
    %v304 = vmul.f32 1.0, %v303
    %v305 = vtanh.pop %v298
    %v306 = vmul.f32 %v304, 0.0
    %308 = vrot.lane.b32.xlu0 %v305, 64
    %v309 = vpop.permute.xlu0 %308
    %v311 = vmul.f32 %v304, %v309
    %313 = vrot.lane.b32.xlu0 %v311, 32
    %v314 = vpop.permute.xlu0 %313
    %v316 = vadd.f32 %v306, %v314
    %v317 = vtanh.pop %v316
    %319 = vrot.lane.b32.xlu0 %v317, 64
    %v320 = vpop.permute.xlu0 %319
    %v322 = vmul.f32 %v304, %v320
    %324 = vrot.lane.b32.xlu0 %v322, 32
    %v325 = vpop.permute.xlu0 %324
    %v326 = vsel %vm224, %v325, 0
    %328 = vmatprep.subr.mxu0 0.0
    %329 = vmatpush1.msra.mxu0 %v220
    %330 = vmatprep.subr.mxu0 0.0
    %331 = vmatpush1.msra.mxu0 %v221
    %332 = vmatprep.subr.mxu0 0.0
    %333 = vmatpush1.msra.mxu0 %v222
    %334 = vmatprep.subr.mxu0 0.0
    %335 = vmatpush1.msra.mxu0 %v223
    %336 = vmatprep.subr.mxu0 0.0
    %337 = vmatpush1.msra.mxu0 0.0
    %338 = vmatprep.subr.mxu0 0.0
    %339 = vmatpush1.msra.mxu0 0.0
    %340 = vmatprep.subr.mxu0 0.0
    %341 = vmatpush1.msra.mxu0 0.0
    %342 = vmatprep.subr.mxu0 0.0
    %343 = vmatpush1.msra.mxu0 0.0
    %344 = vmatprep.subr.mxu0 0.0
    %345 = vmatpush1.msra.mxu0 0.0
    %346 = vmatprep.subr.mxu0 0.0
    %347 = vmatpush1.msra.mxu0 0.0
    %348 = vmatprep.subr.mxu0 0.0
    %349 = vmatpush1.msra.mxu0 0.0
    %350 = vmatprep.subr.mxu0 0.0
    %351 = vmatpush1.msra.mxu0 0.0
    %352 = vmatprep.subr.mxu0 0.0
    %353 = vmatpush1.msra.mxu0 0.0
    %354 = vmatprep.subr.mxu0 0.0
    %355 = vmatpush1.msra.mxu0 0.0
    %356 = vmatprep.subr.mxu0 0.0
    %357 = vmatpush1.msra.mxu0 0.0
    %358 = vmatprep.subr.mxu0 0.0
    %359 = vmatpush1.msra.mxu0 0.0
    %360 = vmatprep.subr.mxu0 0.0
    %361 = vmatpush1.msra.mxu0 0.0
    %362 = vmatprep.subr.mxu0 0.0
    %363 = vmatpush1.msra.mxu0 0.0
    %364 = vmatprep.subr.mxu0 0.0
    %365 = vmatpush1.msra.mxu0 0.0
    %366 = vmatprep.subr.mxu0 0.0
    %367 = vmatpush1.msra.mxu0 0.0
    %368 = vmatprep.subr.mxu0 0.0
    %369 = vmatpush1.msra.mxu0 0.0
    %370 = vmatprep.subr.mxu0 0.0
    %371 = vmatpush1.msra.mxu0 0.0
    %372 = vmatprep.subr.mxu0 0.0
    %373 = vmatpush1.msra.mxu0 0.0
    %374 = vmatprep.subr.mxu0 0.0
    %375 = vmatpush1.msra.mxu0 0.0
    %376 = vmatprep.subr.mxu0 0.0
    %377 = vmatpush1.msra.mxu0 0.0
    %378 = vmatprep.subr.mxu0 0.0
    %379 = vmatpush1.msra.mxu0 0.0
    %380 = vmatprep.subr.mxu0 0.0
    %381 = vmatpush1.msra.mxu0 0.0
    %382 = vmatprep.subr.mxu0 0.0
    %383 = vmatpush1.msra.mxu0 0.0
    %384 = vmatprep.subr.mxu0 0.0
    %385 = vmatpush1.msra.mxu0 0.0
    %386 = vmatprep.subr.mxu0 0.0
    %387 = vmatpush1.msra.mxu0 0.0
    %388 = vmatprep.subr.mxu0 0.0
    %389 = vmatpush1.msra.mxu0 0.0
    %390 = vmatprep.subr.mxu0 0.0
    %391 = vmatpush1.msra.mxu0 0.0
    %392 = vmatprep.mubr.f32.mxu0 0.0
    %393 = vmatmul.mubr.f32.gmra.mrb[0].mxu0 %v326
    %v394 = vpop.f32.mrb[0].mxu0
    %v395 = vadd.f32 0.0, %v394
    %v396 = vpop.f32.mrb[0].mxu0
    %397 = vdwg.mxu0
    %v398 = vadd.f32 %v187, %v395
    %v399 = vxor.u32 %v398, 2147483648
    %v400 = vmul.f32 %v399, 1.442695
    %v401 = vpow.pop %v400
    %v402 = vadd.f32 %v401, 1.0
    %v403 = vrcp.pop %v402
    %v404 = vmul.f32 1.0, %v403
    %v405 = vtanh.pop %v398
    %v406 = vmul.f32 %v404, %v316
    %408 = vrot.lane.b32.xlu0 %v405, 64
    %v409 = vpop.permute.xlu0 %408
    %v411 = vmul.f32 %v404, %v409
    %413 = vrot.lane.b32.xlu0 %v411, 32
    %v414 = vpop.permute.xlu0 %413
    %v416 = vadd.f32 %v406, %v414
    %v417 = vtanh.pop %v416
    %419 = vrot.lane.b32.xlu0 %v417, 64
    %v420 = vpop.permute.xlu0 %419
    %v422 = vmul.f32 %v404, %v420
    %424 = vrot.lane.b32.xlu0 %v422, 32
    %v425 = vpop.permute.xlu0 %424
    %v426 = vsel %vm224, %v425, 0
    %428 = vmatprep.subr.mxu0 0.0
    %429 = vmatpush1.msra.mxu0 %v220
    %430 = vmatprep.subr.mxu0 0.0
    %431 = vmatpush1.msra.mxu0 %v221
    %432 = vmatprep.subr.mxu0 0.0
    %433 = vmatpush1.msra.mxu0 %v222
    %434 = vmatprep.subr.mxu0 0.0
    %435 = vmatpush1.msra.mxu0 %v223
    %436 = vmatprep.subr.mxu0 0.0
    %437 = vmatpush1.msra.mxu0 0.0
    %438 = vmatprep.subr.mxu0 0.0
    %439 = vmatpush1.msra.mxu0 0.0
    %440 = vmatprep.subr.mxu0 0.0
    %441 = vmatpush1.msra.mxu0 0.0
    %442 = vmatprep.subr.mxu0 0.0
    %443 = vmatpush1.msra.mxu0 0.0
    %444 = vmatprep.subr.mxu0 0.0
    %445 = vmatpush1.msra.mxu0 0.0
    %446 = vmatprep.subr.mxu0 0.0
    %447 = vmatpush1.msra.mxu0 0.0
    %448 = vmatprep.subr.mxu0 0.0
    %449 = vmatpush1.msra.mxu0 0.0
    %450 = vmatprep.subr.mxu0 0.0
    %451 = vmatpush1.msra.mxu0 0.0
    %452 = vmatprep.subr.mxu0 0.0
    %453 = vmatpush1.msra.mxu0 0.0
    %454 = vmatprep.subr.mxu0 0.0
    %455 = vmatpush1.msra.mxu0 0.0
    %456 = vmatprep.subr.mxu0 0.0
    %457 = vmatpush1.msra.mxu0 0.0
    %458 = vmatprep.subr.mxu0 0.0
    %459 = vmatpush1.msra.mxu0 0.0
    %460 = vmatprep.subr.mxu0 0.0
    %461 = vmatpush1.msra.mxu0 0.0
    %462 = vmatprep.subr.mxu0 0.0
    %463 = vmatpush1.msra.mxu0 0.0
    %464 = vmatprep.subr.mxu0 0.0
    %465 = vmatpush1.msra.mxu0 0.0
    %466 = vmatprep.subr.mxu0 0.0
    %467 = vmatpush1.msra.mxu0 0.0
    %468 = vmatprep.subr.mxu0 0.0
    %469 = vmatpush1.msra.mxu0 0.0
    %470 = vmatprep.subr.mxu0 0.0
    %471 = vmatpush1.msra.mxu0 0.0
    %472 = vmatprep.subr.mxu0 0.0
    %473 = vmatpush1.msra.mxu0 0.0
    %474 = vmatprep.subr.mxu0 0.0
    %475 = vmatpush1.msra.mxu0 0.0
    %476 = vmatprep.subr.mxu0 0.0
    %477 = vmatpush1.msra.mxu0 0.0
    %478 = vmatprep.subr.mxu0 0.0
    %479 = vmatpush1.msra.mxu0 0.0
    %480 = vmatprep.subr.mxu0 0.0
    %481 = vmatpush1.msra.mxu0 0.0
    %482 = vmatprep.subr.mxu0 0.0
    %483 = vmatpush1.msra.mxu0 0.0
    %484 = vmatprep.subr.mxu0 0.0
    %485 = vmatpush1.msra.mxu0 0.0
    %486 = vmatprep.subr.mxu0 0.0
    %487 = vmatpush1.msra.mxu0 0.0
    %488 = vmatprep.subr.mxu0 0.0
    %489 = vmatpush1.msra.mxu0 0.0
    %490 = vmatprep.subr.mxu0 0.0
    %491 = vmatpush1.msra.mxu0 0.0
    %492 = vmatprep.mubr.f32.mxu0 0.0
    %493 = vmatmul.mubr.f32.gmra.mrb[0].mxu0 %v426
    %v494 = vpop.f32.mrb[0].mxu0
    %v495 = vadd.f32 0.0, %v494
    %v496 = vpop.f32.mrb[0].mxu0
    %497 = vdwg.mxu0
    %v498 = vadd.f32 %v192, %v495
    %v499 = vxor.u32 %v498, 2147483648
    %v500 = vmul.f32 %v499, 1.442695
    %v501 = vpow.pop %v500
    %v502 = vadd.f32 %v501, 1.0
    %v503 = vrcp.pop %v502
    %v504 = vmul.f32 1.0, %v503
    %v505 = vtanh.pop %v498
    %v506 = vmul.f32 %v504, %v416
    %508 = vrot.lane.b32.xlu0 %v505, 64
    %v509 = vpop.permute.xlu0 %508
    %v511 = vmul.f32 %v504, %v509
    %513 = vrot.lane.b32.xlu0 %v511, 32
    %v514 = vpop.permute.xlu0 %513
    %v516 = vadd.f32 %v506, %v514
    %v517 = vtanh.pop %v516
    %519 = vrot.lane.b32.xlu0 %v517, 64
    %v520 = vpop.permute.xlu0 %519
    %v522 = vmul.f32 %v504, %v520
    %524 = vrot.lane.b32.xlu0 %v522, 32
    %v525 = vpop.permute.xlu0 %524
    %v526 = vsel %vm224, %v525, 0
    %528 = vmatprep.subr.mxu0 0.0
    %529 = vmatpush1.msra.mxu0 %v220
    %530 = vmatprep.subr.mxu0 0.0
    %531 = vmatpush1.msra.mxu0 %v221
    %532 = vmatprep.subr.mxu0 0.0
    %533 = vmatpush1.msra.mxu0 %v222
    %534 = vmatprep.subr.mxu0 0.0
    %535 = vmatpush1.msra.mxu0 %v223
    %536 = vmatprep.subr.mxu0 0.0
    %537 = vmatpush1.msra.mxu0 0.0
    %538 = vmatprep.subr.mxu0 0.0
    %539 = vmatpush1.msra.mxu0 0.0
    %540 = vmatprep.subr.mxu0 0.0
    %541 = vmatpush1.msra.mxu0 0.0
    %542 = vmatprep.subr.mxu0 0.0
    %543 = vmatpush1.msra.mxu0 0.0
    %544 = vmatprep.subr.mxu0 0.0
    %545 = vmatpush1.msra.mxu0 0.0
    %546 = vmatprep.subr.mxu0 0.0
    %547 = vmatpush1.msra.mxu0 0.0
    %548 = vmatprep.subr.mxu0 0.0
    %549 = vmatpush1.msra.mxu0 0.0
    %550 = vmatprep.subr.mxu0 0.0
    %551 = vmatpush1.msra.mxu0 0.0
    %552 = vmatprep.subr.mxu0 0.0
    %553 = vmatpush1.msra.mxu0 0.0
    %554 = vmatprep.subr.mxu0 0.0
    %555 = vmatpush1.msra.mxu0 0.0
    %556 = vmatprep.subr.mxu0 0.0
    %557 = vmatpush1.msra.mxu0 0.0
    %558 = vmatprep.subr.mxu0 0.0
    %559 = vmatpush1.msra.mxu0 0.0
    %560 = vmatprep.subr.mxu0 0.0
    %561 = vmatpush1.msra.mxu0 0.0
    %562 = vmatprep.subr.mxu0 0.0
    %563 = vmatpush1.msra.mxu0 0.0
    %564 = vmatprep.subr.mxu0 0.0
    %565 = vmatpush1.msra.mxu0 0.0
    %566 = vmatprep.subr.mxu0 0.0
    %567 = vmatpush1.msra.mxu0 0.0
    %568 = vmatprep.subr.mxu0 0.0
    %569 = vmatpush1.msra.mxu0 0.0
    %570 = vmatprep.subr.mxu0 0.0
    %571 = vmatpush1.msra.mxu0 0.0
    %572 = vmatprep.subr.mxu0 0.0
    %573 = vmatpush1.msra.mxu0 0.0
    %574 = vmatprep.subr.mxu0 0.0
    %575 = vmatpush1.msra.mxu0 0.0
    %576 = vmatprep.subr.mxu0 0.0
    %577 = vmatpush1.msra.mxu0 0.0
    %578 = vmatprep.subr.mxu0 0.0
    %579 = vmatpush1.msra.mxu0 0.0
    %580 = vmatprep.subr.mxu0 0.0
    %581 = vmatpush1.msra.mxu0 0.0
    %582 = vmatprep.subr.mxu0 0.0
    %583 = vmatpush1.msra.mxu0 0.0
    %584 = vmatprep.subr.mxu0 0.0
    %585 = vmatpush1.msra.mxu0 0.0
    %586 = vmatprep.subr.mxu0 0.0
    %587 = vmatpush1.msra.mxu0 0.0
    %588 = vmatprep.subr.mxu0 0.0
    %589 = vmatpush1.msra.mxu0 0.0
    %590 = vmatprep.subr.mxu0 0.0
    %591 = vmatpush1.msra.mxu0 0.0
    %592 = vmatprep.mubr.f32.mxu0 0.0
    %593 = vmatmul.mubr.f32.gmra.mrb[0].mxu0 %v526
    %v594 = vpop.f32.mrb[0].mxu0
    %v595 = vadd.f32 0.0, %v594
    %v596 = vpop.f32.mrb[0].mxu0
    %597 = vdwg.mxu0
    %v598 = vadd.f32 %v197, %v595
    %v599 = vxor.u32 %v598, 2147483648
    %v600 = vmul.f32 %v599, 1.442695
    %v601 = vpow.pop %v600
    %v602 = vadd.f32 %v601, 1.0
    %v603 = vrcp.pop %v602
    %v604 = vmul.f32 1.0, %v603
    %v605 = vtanh.pop %v598
    %v606 = vmul.f32 %v604, %v516
    %608 = vrot.lane.b32.xlu0 %v605, 64
    %v609 = vpop.permute.xlu0 %608
    %v611 = vmul.f32 %v604, %v609
    %613 = vrot.lane.b32.xlu0 %v611, 32
    %v614 = vpop.permute.xlu0 %613
    %v616 = vadd.f32 %v606, %v614
    %v617 = vtanh.pop %v616
    %619 = vrot.lane.b32.xlu0 %v617, 64
    %v620 = vpop.permute.xlu0 %619
    %v622 = vmul.f32 %v604, %v620
    %624 = vrot.lane.b32.xlu0 %v622, 32
    %v625 = vpop.permute.xlu0 %624
    %v626 = vsel %vm224, %v625, 0
    %628 = vmatprep.subr.mxu0 0.0
    %629 = vmatpush1.msra.mxu0 %v220
    %630 = vmatprep.subr.mxu0 0.0
    %631 = vmatpush1.msra.mxu0 %v221
    %632 = vmatprep.subr.mxu0 0.0
    %633 = vmatpush1.msra.mxu0 %v222
    %634 = vmatprep.subr.mxu0 0.0
    %635 = vmatpush1.msra.mxu0 %v223
    %636 = vmatprep.subr.mxu0 0.0
    %637 = vmatpush1.msra.mxu0 0.0
    %638 = vmatprep.subr.mxu0 0.0
    %639 = vmatpush1.msra.mxu0 0.0
    %640 = vmatprep.subr.mxu0 0.0
    %641 = vmatpush1.msra.mxu0 0.0
    %642 = vmatprep.subr.mxu0 0.0
    %643 = vmatpush1.msra.mxu0 0.0
    %644 = vmatprep.subr.mxu0 0.0
    %645 = vmatpush1.msra.mxu0 0.0
    %646 = vmatprep.subr.mxu0 0.0
    %647 = vmatpush1.msra.mxu0 0.0
    %648 = vmatprep.subr.mxu0 0.0
    %649 = vmatpush1.msra.mxu0 0.0
    %650 = vmatprep.subr.mxu0 0.0
    %651 = vmatpush1.msra.mxu0 0.0
    %652 = vmatprep.subr.mxu0 0.0
    %653 = vmatpush1.msra.mxu0 0.0
    %654 = vmatprep.subr.mxu0 0.0
    %655 = vmatpush1.msra.mxu0 0.0
    %656 = vmatprep.subr.mxu0 0.0
    %657 = vmatpush1.msra.mxu0 0.0
    %658 = vmatprep.subr.mxu0 0.0
    %659 = vmatpush1.msra.mxu0 0.0
    %660 = vmatprep.subr.mxu0 0.0
    %661 = vmatpush1.msra.mxu0 0.0
    %662 = vmatprep.subr.mxu0 0.0
    %663 = vmatpush1.msra.mxu0 0.0
    %664 = vmatprep.subr.mxu0 0.0
    %665 = vmatpush1.msra.mxu0 0.0
    %666 = vmatprep.subr.mxu0 0.0
    %667 = vmatpush1.msra.mxu0 0.0
    %668 = vmatprep.subr.mxu0 0.0
    %669 = vmatpush1.msra.mxu0 0.0
    %670 = vmatprep.subr.mxu0 0.0
    %671 = vmatpush1.msra.mxu0 0.0
    %672 = vmatprep.subr.mxu0 0.0
    %673 = vmatpush1.msra.mxu0 0.0
    %674 = vmatprep.subr.mxu0 0.0
    %675 = vmatpush1.msra.mxu0 0.0
    %676 = vmatprep.subr.mxu0 0.0
    %677 = vmatpush1.msra.mxu0 0.0
    %678 = vmatprep.subr.mxu0 0.0
    %679 = vmatpush1.msra.mxu0 0.0
    %680 = vmatprep.subr.mxu0 0.0
    %681 = vmatpush1.msra.mxu0 0.0
    %682 = vmatprep.subr.mxu0 0.0
    %683 = vmatpush1.msra.mxu0 0.0
    %684 = vmatprep.subr.mxu0 0.0
    %685 = vmatpush1.msra.mxu0 0.0
    %686 = vmatprep.subr.mxu0 0.0
    %687 = vmatpush1.msra.mxu0 0.0
    %688 = vmatprep.subr.mxu0 0.0
    %689 = vmatpush1.msra.mxu0 0.0
    %690 = vmatprep.subr.mxu0 0.0
    %691 = vmatpush1.msra.mxu0 0.0
    %692 = vmatprep.mubr.f32.mxu0 0.0
    %693 = vmatmul.mubr.f32.gmra.mrb[0].mxu0 %v626
    %v694 = vpop.f32.mrb[0].mxu0
    %v695 = vadd.f32 0.0, %v694
    %v696 = vpop.f32.mrb[0].mxu0
    %697 = vdwg.mxu0
    %v698 = vadd.f32 %v202, %v695
    %v699 = vxor.u32 %v698, 2147483648
    %v700 = vmul.f32 %v699, 1.442695
    %v701 = vpow.pop %v700
    %v702 = vadd.f32 %v701, 1.0
    %v703 = vrcp.pop %v702
    %v704 = vmul.f32 1.0, %v703
    %v705 = vtanh.pop %v698
    %v706 = vmul.f32 %v704, %v616
    %708 = vrot.lane.b32.xlu0 %v705, 64
    %v709 = vpop.permute.xlu0 %708
    %v711 = vmul.f32 %v704, %v709
    %713 = vrot.lane.b32.xlu0 %v711, 32
    %v714 = vpop.permute.xlu0 %713
    %v716 = vadd.f32 %v706, %v714
    %v717 = vtanh.pop %v716
    %719 = vrot.lane.b32.xlu0 %v717, 64
    %v720 = vpop.permute.xlu0 %719
    %v722 = vmul.f32 %v704, %v720
    %724 = vrot.lane.b32.xlu0 %v722, 32
    %v725 = vpop.permute.xlu0 %724
    %v726 = vsel %vm224, %v725, 0
    %728 = vmatprep.subr.mxu0 0.0
    %729 = vmatpush1.msra.mxu0 %v220
    %730 = vmatprep.subr.mxu0 0.0
    %731 = vmatpush1.msra.mxu0 %v221
    %732 = vmatprep.subr.mxu0 0.0
    %733 = vmatpush1.msra.mxu0 %v222
    %734 = vmatprep.subr.mxu0 0.0
    %735 = vmatpush1.msra.mxu0 %v223
    %736 = vmatprep.subr.mxu0 0.0
    %737 = vmatpush1.msra.mxu0 0.0
    %738 = vmatprep.subr.mxu0 0.0
    %739 = vmatpush1.msra.mxu0 0.0
    %740 = vmatprep.subr.mxu0 0.0
    %741 = vmatpush1.msra.mxu0 0.0
    %742 = vmatprep.subr.mxu0 0.0
    %743 = vmatpush1.msra.mxu0 0.0
    %744 = vmatprep.subr.mxu0 0.0
    %745 = vmatpush1.msra.mxu0 0.0
    %746 = vmatprep.subr.mxu0 0.0
    %747 = vmatpush1.msra.mxu0 0.0
    %748 = vmatprep.subr.mxu0 0.0
    %749 = vmatpush1.msra.mxu0 0.0
    %750 = vmatprep.subr.mxu0 0.0
    %751 = vmatpush1.msra.mxu0 0.0
    %752 = vmatprep.subr.mxu0 0.0
    %753 = vmatpush1.msra.mxu0 0.0
    %754 = vmatprep.subr.mxu0 0.0
    %755 = vmatpush1.msra.mxu0 0.0
    %756 = vmatprep.subr.mxu0 0.0
    %757 = vmatpush1.msra.mxu0 0.0
    %758 = vmatprep.subr.mxu0 0.0
    %759 = vmatpush1.msra.mxu0 0.0
    %760 = vmatprep.subr.mxu0 0.0
    %761 = vmatpush1.msra.mxu0 0.0
    %762 = vmatprep.subr.mxu0 0.0
    %763 = vmatpush1.msra.mxu0 0.0
    %764 = vmatprep.subr.mxu0 0.0
    %765 = vmatpush1.msra.mxu0 0.0
    %766 = vmatprep.subr.mxu0 0.0
    %767 = vmatpush1.msra.mxu0 0.0
    %768 = vmatprep.subr.mxu0 0.0
    %769 = vmatpush1.msra.mxu0 0.0
    %770 = vmatprep.subr.mxu0 0.0
    %771 = vmatpush1.msra.mxu0 0.0
    %772 = vmatprep.subr.mxu0 0.0
    %773 = vmatpush1.msra.mxu0 0.0
    %774 = vmatprep.subr.mxu0 0.0
    %775 = vmatpush1.msra.mxu0 0.0
    %776 = vmatprep.subr.mxu0 0.0
    %777 = vmatpush1.msra.mxu0 0.0
    %778 = vmatprep.subr.mxu0 0.0
    %779 = vmatpush1.msra.mxu0 0.0
    %780 = vmatprep.subr.mxu0 0.0
    %781 = vmatpush1.msra.mxu0 0.0
    %782 = vmatprep.subr.mxu0 0.0
    %783 = vmatpush1.msra.mxu0 0.0
    %784 = vmatprep.subr.mxu0 0.0
    %785 = vmatpush1.msra.mxu0 0.0
    %786 = vmatprep.subr.mxu0 0.0
    %787 = vmatpush1.msra.mxu0 0.0
    %788 = vmatprep.subr.mxu0 0.0
    %789 = vmatpush1.msra.mxu0 0.0
    %790 = vmatprep.subr.mxu0 0.0
    %791 = vmatpush1.msra.mxu0 0.0
    %792 = vmatprep.mubr.f32.mxu0 0.0
    %793 = vmatmul.mubr.f32.gmra.mrb[0].mxu0 %v726
    %v794 = vpop.f32.mrb[0].mxu0
    %v795 = vadd.f32 0.0, %v794
    %v796 = vpop.f32.mrb[0].mxu0
    %797 = vdwg.mxu0
    %v798 = vadd.f32 %v207, %v795
    %v799 = vxor.u32 %v798, 2147483648
    %v800 = vmul.f32 %v799, 1.442695
    %v801 = vpow.pop %v800
    %v802 = vadd.f32 %v801, 1.0
    %v803 = vrcp.pop %v802
    %v804 = vmul.f32 1.0, %v803
    %v805 = vtanh.pop %v798
    %v806 = vmul.f32 %v804, %v716
    %808 = vrot.lane.b32.xlu0 %v805, 64
    %v809 = vpop.permute.xlu0 %808
    %v811 = vmul.f32 %v804, %v809
    %813 = vrot.lane.b32.xlu0 %v811, 32
    %v814 = vpop.permute.xlu0 %813
    %v816 = vadd.f32 %v806, %v814
    %v817 = vtanh.pop %v816
    %819 = vrot.lane.b32.xlu0 %v817, 64
    %v820 = vpop.permute.xlu0 %819
    %v822 = vmul.f32 %v804, %v820
    %824 = vrot.lane.b32.xlu0 %v822, 32
    %v825 = vpop.permute.xlu0 %824
    %v826 = vsel %vm224, %v825, 0
    %828 = vmatprep.subr.mxu0 0.0
    %829 = vmatpush1.msra.mxu0 %v220
    %830 = vmatprep.subr.mxu0 0.0
    %831 = vmatpush1.msra.mxu0 %v221
    %832 = vmatprep.subr.mxu0 0.0
    %833 = vmatpush1.msra.mxu0 %v222
    %834 = vmatprep.subr.mxu0 0.0
    %835 = vmatpush1.msra.mxu0 %v223
    %836 = vmatprep.subr.mxu0 0.0
    %837 = vmatpush1.msra.mxu0 0.0
    %838 = vmatprep.subr.mxu0 0.0
    %839 = vmatpush1.msra.mxu0 0.0
    %840 = vmatprep.subr.mxu0 0.0
    %841 = vmatpush1.msra.mxu0 0.0
    %842 = vmatprep.subr.mxu0 0.0
    %843 = vmatpush1.msra.mxu0 0.0
    %844 = vmatprep.subr.mxu0 0.0
    %845 = vmatpush1.msra.mxu0 0.0
    %846 = vmatprep.subr.mxu0 0.0
    %847 = vmatpush1.msra.mxu0 0.0
    %848 = vmatprep.subr.mxu0 0.0
    %849 = vmatpush1.msra.mxu0 0.0
    %850 = vmatprep.subr.mxu0 0.0
    %851 = vmatpush1.msra.mxu0 0.0
    %852 = vmatprep.subr.mxu0 0.0
    %853 = vmatpush1.msra.mxu0 0.0
    %854 = vmatprep.subr.mxu0 0.0
    %855 = vmatpush1.msra.mxu0 0.0
    %856 = vmatprep.subr.mxu0 0.0
    %857 = vmatpush1.msra.mxu0 0.0
    %858 = vmatprep.subr.mxu0 0.0
    %859 = vmatpush1.msra.mxu0 0.0
    %860 = vmatprep.subr.mxu0 0.0
    %861 = vmatpush1.msra.mxu0 0.0
    %862 = vmatprep.subr.mxu0 0.0
    %863 = vmatpush1.msra.mxu0 0.0
    %864 = vmatprep.subr.mxu0 0.0
    %865 = vmatpush1.msra.mxu0 0.0
    %866 = vmatprep.subr.mxu0 0.0
    %867 = vmatpush1.msra.mxu0 0.0
    %868 = vmatprep.subr.mxu0 0.0
    %869 = vmatpush1.msra.mxu0 0.0
    %870 = vmatprep.subr.mxu0 0.0
    %871 = vmatpush1.msra.mxu0 0.0
    %872 = vmatprep.subr.mxu0 0.0
    %873 = vmatpush1.msra.mxu0 0.0
    %874 = vmatprep.subr.mxu0 0.0
    %875 = vmatpush1.msra.mxu0 0.0
    %876 = vmatprep.subr.mxu0 0.0
    %877 = vmatpush1.msra.mxu0 0.0
    %878 = vmatprep.subr.mxu0 0.0
    %879 = vmatpush1.msra.mxu0 0.0
    %880 = vmatprep.subr.mxu0 0.0
    %881 = vmatpush1.msra.mxu0 0.0
    %882 = vmatprep.subr.mxu0 0.0
    %883 = vmatpush1.msra.mxu0 0.0
    %884 = vmatprep.subr.mxu0 0.0
    %885 = vmatpush1.msra.mxu0 0.0
    %886 = vmatprep.subr.mxu0 0.0
    %887 = vmatpush1.msra.mxu0 0.0
    %888 = vmatprep.subr.mxu0 0.0
    %889 = vmatpush1.msra.mxu0 0.0
    %890 = vmatprep.subr.mxu0 0.0
    %891 = vmatpush1.msra.mxu0 0.0
    %892 = vmatprep.mubr.f32.mxu0 0.0
    %893 = vmatmul.mubr.f32.gmra.mrb[0].mxu0 %v826
    %v894 = vpop.f32.mrb[0].mxu0
    %v895 = vadd.f32 0.0, %v894
    %v896 = vpop.f32.mrb[0].mxu0
    %897 = vdwg.mxu0
    %v898 = vadd.f32 %v212, %v895
    %v899 = vxor.u32 %v898, 2147483648
    %v900 = vmul.f32 %v899, 1.442695
    %v901 = vpow.pop %v900
    %v902 = vadd.f32 %v901, 1.0
    %v903 = vrcp.pop %v902
    %v904 = vmul.f32 1.0, %v903
    %v905 = vtanh.pop %v898
    %v906 = vmul.f32 %v904, %v816
    %908 = vrot.lane.b32.xlu0 %v905, 64
    %v909 = vpop.permute.xlu0 %908
    %v911 = vmul.f32 %v904, %v909
    %913 = vrot.lane.b32.xlu0 %v911, 32
    %v914 = vpop.permute.xlu0 %913
    %v916 = vadd.f32 %v906, %v914
    %v917 = vtanh.pop %v916
    %919 = vrot.lane.b32.xlu0 %v917, 64
    %v920 = vpop.permute.xlu0 %919
    %v922 = vmul.f32 %v904, %v920
    %924 = vrot.lane.b32.xlu0 %v922, 32
    %v925 = vpop.permute.xlu0 %924
    %v926 = vsel %vm224, %v925, 0
    %928 = vmatprep.subr.mxu0 0.0
    %929 = vmatpush1.msra.mxu0 %v220
    %930 = vmatprep.subr.mxu0 0.0
    %931 = vmatpush1.msra.mxu0 %v221
    %932 = vmatprep.subr.mxu0 0.0
    %933 = vmatpush1.msra.mxu0 %v222
    %934 = vmatprep.subr.mxu0 0.0
    %935 = vmatpush1.msra.mxu0 %v223
    %936 = vmatprep.subr.mxu0 0.0
    %937 = vmatpush1.msra.mxu0 0.0
    %938 = vmatprep.subr.mxu0 0.0
    %939 = vmatpush1.msra.mxu0 0.0
    %940 = vmatprep.subr.mxu0 0.0
    %941 = vmatpush1.msra.mxu0 0.0
    %942 = vmatprep.subr.mxu0 0.0
    %943 = vmatpush1.msra.mxu0 0.0
    %944 = vmatprep.subr.mxu0 0.0
    %945 = vmatpush1.msra.mxu0 0.0
    %946 = vmatprep.subr.mxu0 0.0
    %947 = vmatpush1.msra.mxu0 0.0
    %948 = vmatprep.subr.mxu0 0.0
    %949 = vmatpush1.msra.mxu0 0.0
    %950 = vmatprep.subr.mxu0 0.0
    %951 = vmatpush1.msra.mxu0 0.0
    %952 = vmatprep.subr.mxu0 0.0
    %953 = vmatpush1.msra.mxu0 0.0
    %954 = vmatprep.subr.mxu0 0.0
    %955 = vmatpush1.msra.mxu0 0.0
    %956 = vmatprep.subr.mxu0 0.0
    %957 = vmatpush1.msra.mxu0 0.0
    %958 = vmatprep.subr.mxu0 0.0
    %959 = vmatpush1.msra.mxu0 0.0
    %960 = vmatprep.subr.mxu0 0.0
    %961 = vmatpush1.msra.mxu0 0.0
    %962 = vmatprep.subr.mxu0 0.0
    %963 = vmatpush1.msra.mxu0 0.0
    %964 = vmatprep.subr.mxu0 0.0
    %965 = vmatpush1.msra.mxu0 0.0
    %966 = vmatprep.subr.mxu0 0.0
    %967 = vmatpush1.msra.mxu0 0.0
    %968 = vmatprep.subr.mxu0 0.0
    %969 = vmatpush1.msra.mxu0 0.0
    %970 = vmatprep.subr.mxu0 0.0
    %971 = vmatpush1.msra.mxu0 0.0
    %972 = vmatprep.subr.mxu0 0.0
    %973 = vmatpush1.msra.mxu0 0.0
    %974 = vmatprep.subr.mxu0 0.0
    %975 = vmatpush1.msra.mxu0 0.0
    %976 = vmatprep.subr.mxu0 0.0
    %977 = vmatpush1.msra.mxu0 0.0
    %978 = vmatprep.subr.mxu0 0.0
    %979 = vmatpush1.msra.mxu0 0.0
    %980 = vmatprep.subr.mxu0 0.0
    %981 = vmatpush1.msra.mxu0 0.0
    %982 = vmatprep.subr.mxu0 0.0
    %983 = vmatpush1.msra.mxu0 0.0
    %984 = vmatprep.subr.mxu0 0.0
    %985 = vmatpush1.msra.mxu0 0.0
    %986 = vmatprep.subr.mxu0 0.0
    %987 = vmatpush1.msra.mxu0 0.0
    %988 = vmatprep.subr.mxu0 0.0
    %989 = vmatpush1.msra.mxu0 0.0
    %990 = vmatprep.subr.mxu0 0.0
    %991 = vmatpush1.msra.mxu0 0.0
    %992 = vmatprep.mubr.f32.mxu0 0.0
    %993 = vmatmul.mubr.f32.gmra.mrb[0].mxu0 %v926
    %v994 = vpop.f32.mrb[0].mxu0
    %v995 = vadd.f32 0.0, %v994
    %v996 = vpop.f32.mrb[0].mxu0
    %997 = vdwg.mxu0
    %v998 = vadd.f32 %v217, %v995
    %v999 = vxor.u32 %v998, 2147483648
    %v1000 = vmul.f32 %v999, 1.442695
    %v1001 = vpow.pop %v1000
    %v1002 = vadd.f32 %v1001, 1.0
    %v1003 = vrcp.pop %v1002
    %v1004 = vmul.f32 1.0, %v1003
    %v1005 = vtanh.pop %v998
    %v1006 = vmul.f32 %v1004, %v916
    %1008 = vrot.lane.b32.xlu0 %v1005, 64
    %v1009 = vpop.permute.xlu0 %1008
    %v1011 = vmul.f32 %v1004, %v1009
    %1013 = vrot.lane.b32.xlu0 %v1011, 32
    %v1014 = vpop.permute.xlu0 %1013
    %v1016 = vadd.f32 %v1006, %v1014
    %v1017 = vtanh.pop %v1016
    %1019 = vrot.lane.b32.xlu0 %v1017, 64
    %v1020 = vpop.permute.xlu0 %1019
    %v1022 = vmul.f32 %v1004, %v1020
    %v1023 = vld [vmem:[#allocation2 + $0x58] sm:$0xff]
    %v1024 = vld [vmem:[#allocation2 + $0x60] sm:$0xff]
    %v1025 = vld [vmem:[#allocation2 + $0x68] sm:$0xff]
    %v1026 = vld [vmem:[#allocation2 + $0x70] sm:$0xff]
    %v1027 = vld [vmem:[#allocation2 + $0x78] sm:$0x1]
    %v1028 = vlaneseq
    %v1029 = vshrl.u32 %v1028, 7
    %v1030 = vsub.s32 0, %v1029
    %v1031 = vrot.slane %v1027, %v1030
    %1033 = vrot.lane.b32.xlu0 %v1022, 32
    %v1034 = vpop.permute.xlu0 %1033
    %v1035 = vsel %vm224, %v1034, 0
    %1037 = vmatprep.subr.mxu0 0.0
    %1038 = vmatpush1.msra.mxu0 %v1023
    %1039 = vmatprep.subr.mxu0 0.0
    %1040 = vmatpush1.msra.mxu0 %v1024
    %1041 = vmatprep.subr.mxu0 0.0
    %1042 = vmatpush1.msra.mxu0 %v1025
    %1043 = vmatprep.subr.mxu0 0.0
    %1044 = vmatpush1.msra.mxu0 %v1026
    %1045 = vmatprep.subr.mxu0 0.0
    %1046 = vmatpush1.msra.mxu0 0.0
    %1047 = vmatprep.subr.mxu0 0.0
    %1048 = vmatpush1.msra.mxu0 0.0
    %1049 = vmatprep.subr.mxu0 0.0
    %1050 = vmatpush1.msra.mxu0 0.0
    %1051 = vmatprep.subr.mxu0 0.0
    %1052 = vmatpush1.msra.mxu0 0.0
    %1053 = vmatprep.subr.mxu0 0.0
    %1054 = vmatpush1.msra.mxu0 0.0
    %1055 = vmatprep.subr.mxu0 0.0
    %1056 = vmatpush1.msra.mxu0 0.0
    %1057 = vmatprep.subr.mxu0 0.0
    %1058 = vmatpush1.msra.mxu0 0.0
    %1059 = vmatprep.subr.mxu0 0.0
    %1060 = vmatpush1.msra.mxu0 0.0
    %1061 = vmatprep.subr.mxu0 0.0
    %1062 = vmatpush1.msra.mxu0 0.0
    %1063 = vmatprep.subr.mxu0 0.0
    %1064 = vmatpush1.msra.mxu0 0.0
    %1065 = vmatprep.subr.mxu0 0.0
    %1066 = vmatpush1.msra.mxu0 0.0
    %1067 = vmatprep.subr.mxu0 0.0
    %1068 = vmatpush1.msra.mxu0 0.0
    %1069 = vmatprep.subr.mxu0 0.0
    %1070 = vmatpush1.msra.mxu0 0.0
    %1071 = vmatprep.subr.mxu0 0.0
    %1072 = vmatpush1.msra.mxu0 0.0
    %1073 = vmatprep.subr.mxu0 0.0
    %1074 = vmatpush1.msra.mxu0 0.0
    %1075 = vmatprep.subr.mxu0 0.0
    %1076 = vmatpush1.msra.mxu0 0.0
    %1077 = vmatprep.subr.mxu0 0.0
    %1078 = vmatpush1.msra.mxu0 0.0
    %1079 = vmatprep.subr.mxu0 0.0
    %1080 = vmatpush1.msra.mxu0 0.0
    %1081 = vmatprep.subr.mxu0 0.0
    %1082 = vmatpush1.msra.mxu0 0.0
    %1083 = vmatprep.subr.mxu0 0.0
    %1084 = vmatpush1.msra.mxu0 0.0
    %1085 = vmatprep.subr.mxu0 0.0
    %1086 = vmatpush1.msra.mxu0 0.0
    %1087 = vmatprep.subr.mxu0 0.0
    %1088 = vmatpush1.msra.mxu0 0.0
    %1089 = vmatprep.subr.mxu0 0.0
    %1090 = vmatpush1.msra.mxu0 0.0
    %1091 = vmatprep.subr.mxu0 0.0
    %1092 = vmatpush1.msra.mxu0 0.0
    %1093 = vmatprep.subr.mxu0 0.0
    %1094 = vmatpush1.msra.mxu0 0.0
    %1095 = vmatprep.subr.mxu0 0.0
    %1096 = vmatpush1.msra.mxu0 0.0
    %1097 = vmatprep.subr.mxu0 0.0
    %1098 = vmatpush1.msra.mxu0 0.0
    %1099 = vmatprep.subr.mxu0 0.0
    %1100 = vmatpush1.msra.mxu0 0.0
    %1101 = vmatprep.mubr.f32.mxu0 0.0
    %1102 = vmatmul.mubr.f32.gmra.mrb[0].mxu0 %v1035
    %v1103 = vpop.f32.mrb[0].mxu0
    %v1104 = vadd.f32 %v1031, %v1103
    %v1105 = vpop.f32.mrb[0].mxu0
    %1106 = vdwg.mxu0
    %v1107 = vxor.u32 %v1104, 2147483648
    %v1108 = vmul.f32 %v1107, 1.442695
    %v1109 = vpow.pop %v1108
    %v1110 = vadd.f32 %v1109, 1.0
    %v1111 = vrcp.pop %v1110
    %v1112 = vmul.f32 1.0, %v1111
    %1113 = vst [vmem:[%s2] sm:$0xff] %v1112
    // Predicated region
    $region14: #{bilstm_forward.1} parent=1 // pred_check
      _
    $region15: #{bilstm_forward.1} parent=1 // pred_check_branch
      %1115 = sbr.rel (0) target = $region17
    $region16: #{bilstm_forward.1} parent=1 // pred_region
      _
    $region17: #{bilstm_forward.1} parent=1 // pred_fallthru
      _
    // Predicated region
    $region18: #{bilstm_forward.1} parent=1 // pred_check
      _
    $region19: #{bilstm_forward.1} parent=1 // pred_check_branch
      %1117 = sbr.rel (0) target = $region21
    $region20: #{bilstm_forward.1} parent=1 // pred_region
      _
    $region21: #{bilstm_forward.1} parent=1 // pred_fallthru
      _
    %1118 = vsyncpa [#allocation3], 1

</llo_original>
